<compile_context>
chip_gen: v5e
topology: v5e:2x2
jax: 0.10.0
libtpu: 0.0.40
codegen_flags: <defaults>
</compile_context>

<pallas_src>
import jax
import jax.numpy as jnp
from jax.experimental import pallas as pl
from jax.experimental.pallas import tpu as pltpu

_LANES = 512          # lane-dense last dim (multiple of 128 -> full vregs)
_MAX_TILE_ROWS = 2048  # 2048 x 512 f32 = 4 MiB per input tile


def _make_wmse_kernel(threshold, weight, rows, tile_rows, lanes,
                      steps_per_part, needs_mask):
    """threshold/weight/rows/tile_rows/... are Python scalars (compile-time)."""

    def kernel(p_ref, t_ref, o_ref, acc_ref):
        part = pl.program_id(0)   # parallel axis (row-range partition)
        j = pl.program_id(1)      # reduction axis (steps within partition)

        p = p_ref[...].astype(jnp.float32)
        t = t_ref[...].astype(jnp.float32)
        diff = p - t
        wts = jnp.where(t < threshold, weight, 1.0)
        vals = diff * diff * wts

        if needs_mask:
            # Partial last block: rows beyond `rows` hold Pallas block-padding
            # garbage (and would differ between p and t) -> zero them.
            block_idx = part * steps_per_part + j
            row_ids = jax.lax.broadcasted_iota(jnp.int32, (tile_rows, lanes), 0)
            vals = jnp.where(row_ids < (rows - block_idx * tile_rows), vals, 0.0)

        if tile_rows % 8 == 0:
            # General path: accumulate into a vreg-shaped (8, lanes) scratch
            # with pure VPU vreg adds; flush once per partition.
            @pl.when(j == 0)
            def _():
                acc_ref[...] = jnp.zeros_like(acc_ref)

            acc_ref[...] += vals.reshape(tile_rows // 8, 8, lanes).sum(axis=0)

            @pl.when(j == pl.num_programs(1) - 1)
            def _():
                o_ref[...] = acc_ref[...]
        else:
            # Single-block case (rows <= _MAX_TILE_ROWS and not a multiple of
            # 8): one grid step total, reduce directly and place the per-lane
            # partial sums in sublane 0 of the (8, lanes) output slab.
            s = vals.sum(axis=0, keepdims=True)                      # (1, lanes)
            sub_ids = jax.lax.broadcasted_iota(jnp.int32, (8, lanes), 0)
            o_ref[...] = jnp.where(sub_ids == 0, s, 0.0)

    return kernel


def weighted_mse_loss(predictions, targets, threshold, weight=2.0):
    """Pallas equivalent of WeightedMSELoss.forward(predictions, targets)."""
    assert predictions.shape == targets.shape, "shape mismatch"
    threshold = float(threshold)
    weight = float(weight)
    total = int(predictions.size)
    assert total > 0
    out_dtype = predictions.dtype

    p_flat = predictions.reshape(-1)
    t_flat = targets.reshape(-1)

    # Lane-dense slab (rows, 512).  Reshape of contiguous data is free; a pad
    # (full copy) is only emitted when the tail is not a multiple of 512.
    rem = total % _LANES
    if rem:
        # TODO(synk): could also mask the lane tail in-kernel to avoid this copy.
        pad_amt = _LANES - rem
        p_flat = jnp.pad(p_flat, (0, pad_amt))
        t_flat = jnp.pad(t_flat, (0, pad_amt))
    rows = p_flat.size // _LANES
    p2 = p_flat.reshape(rows, _LANES)
    t2 = t_flat.reshape(rows, _LANES)

    tile_rows = rows if rows <= _MAX_TILE_ROWS else _MAX_TILE_ROWS
    num_blocks = pl.cdiv(rows, tile_rows)

    # Split across 2 TensorCores (v7x) when the block count divides evenly;
    # neutral on single-TC v5e/v6e.
    num_parts = 2 if (num_blocks >= 2 and num_blocks % 2 == 0) else 1
    steps_per_part = num_blocks // num_parts

    needs_mask = (num_parts * steps_per_part * tile_rows) != rows

    kernel = _make_wmse_kernel(threshold, weight, rows, tile_rows, _LANES,
                               steps_per_part, needs_mask)

    grid = (num_parts, steps_per_part)
    bytes_accessed = 2 * rows * _LANES * 4 + num_parts * 8 * _LANES * 4

    partials = pl.pallas_call(
        kernel,
        out_shape=jax.ShapeDtypeStruct((num_parts * 8, _LANES), jnp.float32),
        grid=grid,
        in_specs=[
            pl.BlockSpec((tile_rows, _LANES),
                         lambda p, j: (p * steps_per_part + j, 0)),
            pl.BlockSpec((tile_rows, _LANES),
                         lambda p, j: (p * steps_per_part + j, 0)),
        ],
        out_specs=pl.BlockSpec((8, _LANES), lambda p, j: (p, 0)),
        scratch_shapes=[pltpu.VMEM((8, _LANES), jnp.float32)],
        compiler_params=pltpu.CompilerParams(
            dimension_semantics=("parallel", "arbitrary"),
            vmem_limit_bytes=32 * 1024 * 1024,
        ),
        cost_estimate=pl.CostEstimate(
            flops=6 * rows * _LANES,
            transcendentals=0,
            bytes_accessed=bytes_accessed,
        ),
    )(p2, t2)

    # Tiny epilogue: combine per-partition partial sums and apply 1/N.
    return (jnp.sum(partials) / total).astype(out_dtype)


class WeightedMSELossJax:
    """Mirror of the PyTorch module: holds scalar hyper-params threshold & weight."""

    def __init__(self, threshold, weight=2.0):
        self.threshold = float(threshold)
        self.weight = float(weight)

    def __call__(self, predictions, targets):
        return weighted_mse_loss(predictions, targets, self.threshold, self.weight)


if __name__ == "__main__":
    key = jax.random.PRNGKey(0)
    kp, kt = jax.random.split(key)
    # NCHW-ish small shapes, same convention as the PyTorch tests.
    predictions = jax.random.normal(kp, (2, 4, 16, 16), dtype=jnp.float32)
    targets = jax.random.normal(kt, (2, 4, 16, 16), dtype=jnp.float32)

    module = WeightedMSELossJax(threshold=0.0, weight=2.0)
    loss = jax.block_until_ready(module(predictions, targets))

    # Reference: plain-JAX version of the PyTorch forward.
    mse = (predictions - targets) ** 2
    wts = jnp.where(targets < 0.0, 2.0, 1.0)
    ref = jnp.mean(mse * wts)

    assert loss.shape == () and loss.dtype == predictions.dtype
    assert jnp.allclose(loss, ref, rtol=1e-5, atol=1e-5), (float(loss), float(ref))

    print("KERNEL_OK")
</pallas_src>

<mosaic_0001>
module attributes {stable_mosaic.version = 11 : i64} {
  func.func @kernel(%arg0: i32, %arg1: i32, %arg2: memref<4x512xf32, #tpu.memory_space<vmem>>, %arg3: memref<4x512xf32, #tpu.memory_space<vmem>>, %arg4: memref<8x512xf32, #tpu.memory_space<vmem>>, %arg5: memref<8x512xf32, #tpu.memory_space<vmem>>) attributes {dimension_semantics = [#tpu.dimension_semantics<parallel>, #tpu.dimension_semantics<arbitrary>], iteration_bounds = array<i64: 1, 1>, scalar_prefetch = 0 : i64, scratch_operands = 1 : i64, tpu.core_type = #tpu.core_type<tc>, window_params = [{transform_indices = @transform_0, window_bounds = array<i64: 4, 512>}, {transform_indices = @transform_1, window_bounds = array<i64: 4, 512>}, {transform_indices = @transform_2, window_bounds = array<i64: 8, 512>}]} {
    %c0 = arith.constant 0 : index
    %c0_0 = arith.constant 0 : index
    %0 = vector.load %arg2[%c0, %c0_0] : memref<4x512xf32, #tpu.memory_space<vmem>>, vector<4x512xf32>
    %c0_1 = arith.constant 0 : index
    %c0_2 = arith.constant 0 : index
    %1 = vector.load %arg3[%c0_1, %c0_2] : memref<4x512xf32, #tpu.memory_space<vmem>>, vector<4x512xf32>
    %2 = arith.subf %0, %1 : vector<4x512xf32>
    %cst = arith.constant 0.000000e+00 : f32
    %3 = vector.broadcast %cst : f32 to vector<4x512xf32>
    %4 = arith.cmpf olt, %1, %3 : vector<4x512xf32>
    %cst_3 = arith.constant 2.000000e+00 : f32
    %cst_4 = arith.constant 1.000000e+00 : f32
    %5 = vector.broadcast %cst_3 : f32 to vector<4x512xf32>
    %6 = vector.broadcast %cst_4 : f32 to vector<4x512xf32>
    %7 = arith.select %4, %5, %6 : vector<4x512xi1>, vector<4x512xf32>
    %8 = arith.mulf %2, %2 : vector<4x512xf32>
    %9 = arith.mulf %8, %7 : vector<4x512xf32>
    %cst_5 = arith.constant dense<0.000000e+00> : vector<512xf32>
    %10 = vector.multi_reduction <add>, %9, %cst_5 [0] : vector<4x512xf32> to vector<512xf32>
    %11 = vector.shape_cast %10 : vector<512xf32> to vector<1x512xf32>
    %12 = tpu.iota {dimensions = array<i32: 0>} : vector<8x512xi32>
    %c0_i32 = arith.constant 0 : i32
    %13 = vector.broadcast %c0_i32 : i32 to vector<8x512xi32>
    %14 = arith.cmpi eq, %12, %13 : vector<8x512xi32>
    %cst_6 = arith.constant 0.000000e+00 : f32
    %15 = vector.shape_cast %11 : vector<1x512xf32> to vector<1x512xf32>
    %16 = vector.broadcast %15 : vector<1x512xf32> to vector<8x512xf32>
    %17 = vector.broadcast %cst_6 : f32 to vector<8x512xf32>
    %18 = arith.select %14, %16, %17 : vector<8x512xi1>, vector<8x512xf32>
    %c0_7 = arith.constant 0 : index
    %c0_8 = arith.constant 0 : index
    %19 = vector.load %arg4[%c0_7, %c0_8] : memref<8x512xf32, #tpu.memory_space<vmem>>, vector<8x512xf32>
    tpu.vector_store %arg4[%c0_7, %c0_8], %18 {strides = array<i32>} : memref<8x512xf32, #tpu.memory_space<vmem>>, vector<8x512xf32>,
    return
  }
  func.func @transform_0(%arg0: i32, %arg1: i32) -> (i32, i32) {
    %c1_i32 = arith.constant 1 : i32
    %0 = arith.muli %arg0, %c1_i32 : i32
    %1 = arith.addi %0, %arg1 : i32
    %c0_i32 = arith.constant 0 : i32
    %c0_i32_0 = arith.constant 0 : i32
    return %1, %c0_i32 : i32, i32
  }
  func.func @transform_1(%arg0: i32, %arg1: i32) -> (i32, i32) {
    %c1_i32 = arith.constant 1 : i32
    %0 = arith.muli %arg0, %c1_i32 : i32
    %1 = arith.addi %0, %arg1 : i32
    %c0_i32 = arith.constant 0 : i32
    %c0_i32_0 = arith.constant 0 : i32
    return %1, %c0_i32 : i32, i32
  }
  func.func @transform_2(%arg0: i32, %arg1: i32) -> (i32, i32) {
    %c0_i32 = arith.constant 0 : i32
    %c0_i32_0 = arith.constant 0 : i32
    return %arg0, %c0_i32 : i32, i32
  }
}

</mosaic_0001>

<llo_original>
// kernel: tpu_custom_call.1
$region0: #{tpu_custom_call.1}
  #allocation0 [shape = 'u32[]', space=smem, size = 0x4, offset = 0x4, fixed_abs, tag = 'smem constant byte address 0x4 - core index']
  #allocation1 [shape = 'u32[72,128]{1,0:T(1,128)}', space=vmem, size = 0x9000, scoped, tag = 'internal scratch']
  #allocation2 [shape = 'f32[8,512]{1,0:T(8,128)}', space=vmem, size = 0x4000, scoped, tag = 'scratch operand']
  %s0 = inlined_call_operand.hbm [shape: f32[4,512], index: 0, kind: input, shape index: {}]
  %s1 = inlined_call_operand.hbm [shape: f32[4,512], index: 1, kind: input, shape index: {}]
  %s2 = inlined_call_operand.hbm [shape: f32[8,512], index: 2, kind: output, shape index: {}]
  %s3 = sld [smem:[#allocation0]]
  $region26: #{tpu_custom_call.1} parent=0
    _
  %s5 = ssub.s32 1, %s3
  %s6 = scalar_select 0, %s5, %s3
  $region1: #{tpu_custom_call.1} parent=0
    #allocation3 [shape = 'u8[8192]{0}', space=vmem, size = 0x2000, scoped, tag = 'input window, operand 0, single buffered']
    #allocation4 [shape = 's32[1]{0}', space=sflag, size = 0x4, scoped, tag = 'scoped memory for tpu_custom_call.1']
    #allocation5 [shape = 's32[1]{0}', space=sflag, size = 0x4, scoped, tag = 'scoped memory for tpu_custom_call.1']
    #allocation6 [shape = 'u8[8192]{0}', space=vmem, size = 0x2000, scoped, tag = 'input window, operand 1, single buffered']
    #allocation7 [shape = 's32[1]{0}', space=sflag, size = 0x4, scoped, tag = 'scoped memory for tpu_custom_call.1']
    #allocation8 [shape = 'u8[16384]{0}', space=vmem, size = 0x4000, scoped, tag = 'output window, operand 0, single buffered']
    %7 = vsyncpa [#allocation4], 0
    %8 = vsyncpa [#allocation7], 0
    %9 = vsyncpa [#allocation5], 0
    // Predicated region
    $region2: #{tpu_custom_call.1} parent=1 // pred_check
      _
    $region3: #{tpu_custom_call.1} parent=1 // pred_check_branch
      %11 = sbr.rel (0) target = $region5
    $region4: #{tpu_custom_call.1} parent=1 // pred_region
      %s12 = sadd.s32 0, 0
      %14 = vsyncadd [#allocation4], 0
      %s15 = smul.addr %s12, 4
      %s16 = smul.addr %s15, 4
      %s17 = scalar_lea.hbm %s0, %s16
      %s19 = sshll.u32 %s17, 4
      %s20 = int_to_ptr.hbm [resolvable:$true] %s19
      %s21 = sshll.u32 [#allocation3], 4
      %s22 = int_to_ptr.vmem [resolvable:$true] %s21
      %24 = dma.hbm_to_vmem [thread:$0]  %s20, 256, %s22, [#allocation4]
    $region5: #{tpu_custom_call.1} parent=1 // pred_fallthru
      _
    // Predicated region
    $region6: #{tpu_custom_call.1} parent=1 // pred_check
      _
    $region7: #{tpu_custom_call.1} parent=1 // pred_check_branch
      %26 = sbr.rel (0) target = $region9
    $region8: #{tpu_custom_call.1} parent=1 // pred_region
      %s27 = sadd.s32 0, 0
      %29 = vsyncadd [#allocation7], 0
      %s30 = smul.addr %s27, 4
      %s31 = smul.addr %s30, 4
      %s32 = scalar_lea.hbm %s1, %s31
      %s34 = sshll.u32 %s32, 4
      %s35 = int_to_ptr.hbm [resolvable:$true] %s34
      %s36 = sshll.u32 [#allocation6], 4
      %s37 = int_to_ptr.vmem [resolvable:$true] %s36
      %39 = dma.hbm_to_vmem [thread:$0]  %s35, 256, %s37, [#allocation7]
    $region9: #{tpu_custom_call.1} parent=1 // pred_fallthru
      _
    // Predicated region
    $region10: #{tpu_custom_call.1} parent=1 // pred_check
      _
    $region11: #{tpu_custom_call.1} parent=1 // pred_check_branch
      %41 = sbr.rel (0) target = $region13
    $region12: #{tpu_custom_call.1} parent=1 // pred_region
      %43 = dma.done [#allocation4], 256
    $region13: #{tpu_custom_call.1} parent=1 // pred_fallthru
      _
    // Predicated region
    $region14: #{tpu_custom_call.1} parent=1 // pred_check
      _
    $region15: #{tpu_custom_call.1} parent=1 // pred_check_branch
      %45 = sbr.rel (0) target = $region17
    $region16: #{tpu_custom_call.1} parent=1 // pred_region
      %47 = dma.done [#allocation7], 256
    $region17: #{tpu_custom_call.1} parent=1 // pred_fallthru
      _
    %s48 = sadd.s32 0, 0
    %s49 = sadd.s32 0, 0
    %v50 = vld [vmem:[#allocation3] sm:$0xff]
    %v51 = vld [vmem:[#allocation3 + $0x8] sm:$0xff]
    %v52 = vld [vmem:[#allocation6] sm:$0xff]
    %v53 = vld [vmem:[#allocation6 + $0x8] sm:$0xff]
    %v54 = vsub.f32 %v50, %v52
    %v55 = vsub.f32 %v51, %v53
    %vm56 = vcmp.lt.f32.partialorder %v52, 0.0
    %vm57 = vcmp.lt.f32.partialorder %v53, 0.0
    %v58 = vsel %vm56, 2.0, 1.0
    %v59 = vsel %vm57, 2.0, 1.0
    %v60 = vmul.f32 %v54, %v54
    %v61 = vmul.f32 %v55, %v55
    %v62 = vmul.f32 %v60, %v58
    %v63 = vmul.f32 %v61, %v59
    %66 = vst [vmem:[#allocation1] ss:$2 sm:$0xff] %v62
    %s67 = scalar_lea.vmem [#allocation1], 16
    %68 = vst [vmem:[%s67] ss:$2 sm:$0xff] %v63
    %v69 = vld.sshfl [vmem:[#allocation1] sm:$0xff pattern:$0x75316420]
    %v70 = vld.sshfl [vmem:[#allocation1 + $0x8] sm:$0xff pattern:$0x75316420]
    %v71 = vld.sshfl [vmem:[#allocation1 + $0x10] sm:$0xff pattern:$0x75316420]
    %v72 = vld.sshfl [vmem:[#allocation1 + $0x18] sm:$0xff pattern:$0x75316420]
    %vm77 = vcmask 1043456
    %v78 = vsel %vm77, %v69, 0.0
    %v79 = vrot.slane %v78, 4
    %v80 = vadd.f32 %v78, %v79
    %v81 = vrot.slane %v80, 2
    %v82 = vadd.f32 %v80, %v81
    %v83 = vrot.slane %v82, 1
    %v84 = vadd.f32 %v82, %v83
    %v85 = vsel %vm77, %v70, 0.0
    %v86 = vrot.slane %v85, 4
    %v87 = vadd.f32 %v85, %v86
    %v88 = vrot.slane %v87, 2
    %v89 = vadd.f32 %v87, %v88
    %v90 = vrot.slane %v89, 1
    %v91 = vadd.f32 %v89, %v90
    %v92 = vsel %vm77, %v71, 0.0
    %v93 = vrot.slane %v92, 4
    %v94 = vadd.f32 %v92, %v93
    %v95 = vrot.slane %v94, 2
    %v96 = vadd.f32 %v94, %v95
    %v97 = vrot.slane %v96, 1
    %v98 = vadd.f32 %v96, %v97
    %v99 = vsel %vm77, %v72, 0.0
    %v100 = vrot.slane %v99, 4
    %v101 = vadd.f32 %v99, %v100
    %v102 = vrot.slane %v101, 2
    %v103 = vadd.f32 %v101, %v102
    %v104 = vrot.slane %v103, 1
    %v105 = vadd.f32 %v103, %v104
    %v106 = vlaneseq
    %v107 = vshrl.u32 %v106, 7
    %vm108 = vcmp.eq.s32.totalorder %v107, 0
    %v109 = vsel %vm108, %v84, 0.0
    %v110 = vsel %vm108, %v91, 0.0
    %v111 = vsel %vm108, %v98, 0.0
    %v112 = vsel %vm108, %v105, 0.0
    %113 = vst [vmem:[#allocation8] sm:$0xff] %v109
    %114 = vst [vmem:[#allocation8 + $0x8] sm:$0xff] %v110
    %115 = vst [vmem:[#allocation8 + $0x10] sm:$0xff] %v111
    %116 = vst [vmem:[#allocation8 + $0x18] sm:$0xff] %v112
    // Predicated region
    $region18: #{tpu_custom_call.1} parent=1 // pred_check
      _
    $region19: #{tpu_custom_call.1} parent=1 // pred_check_branch
      %118 = sbr.rel (0) target = $region21
    $region20: #{tpu_custom_call.1} parent=1 // pred_region
      %120 = vsyncadd [#allocation5], 0
      %s122 = sshll.u32 [#allocation8], 4
      %s123 = int_to_ptr.vmem [resolvable:$true] %s122
      %s124 = sshll.u32 %s2, 4
      %s125 = int_to_ptr.hbm [resolvable:$true] %s124
      %127 = dma.vmem_to_hbm [thread:$0]  %s123, 512, %s125, [#allocation5]
    $region21: #{tpu_custom_call.1} parent=1 // pred_fallthru
      _
    // Predicated region
    $region22: #{tpu_custom_call.1} parent=1 // pred_check
      _
    $region23: #{tpu_custom_call.1} parent=1 // pred_check_branch
      %129 = sbr.rel (0) target = $region25
    $region24: #{tpu_custom_call.1} parent=1 // pred_region
      %131 = dma.done [#allocation5], 512
    $region25: #{tpu_custom_call.1} parent=1 // pred_fallthru
      _
    %132 = vsyncpa [#allocation4], 1
    %133 = vsyncpa [#allocation7], 1
    %134 = vsyncpa [#allocation5], 1

</llo_original>
